<compile_context>
chip_gen: v5e
topology: v5e:2x2
jax: 0.10.0
libtpu: 0.0.40
codegen_flags: <defaults>
</compile_context>

<pallas_src>
import functools

import jax
import jax.numpy as jnp
from jax.experimental import pallas as pl
from jax.experimental.pallas import tpu as pltpu


def _round_up(x, m):
    return ((x + m - 1) // m) * m


def _fit_tile(t, dim, align):
    """Clamp tile `t` to a multiple of `align` that divides round_up(dim, align)."""
    dim_pad = _round_up(dim, align)
    t = min(_round_up(t, align), dim_pad)
    while dim_pad % t:
        t -= align
    return t, dim_pad


def _fixed_linear_kernel(x_ref, w_ref, b_ref, o_ref, acc_ref, *,
                         tk, w_is_slab, x_is_slab):
    # x_ref : (tm, tk)      streamed  OR (tm, K_pad) resident slab (x_is_slab)
    # w_ref : (tk, tn)      streamed  OR (K_pad, tn) resident slab (w_is_slab)
    # b_ref : (1, tn)       bias tile for output-column tile j (f32)
    # o_ref : (tm, tn)      output tile, written on the last k step only
    # acc_ref: (tm, tn) f32 accumulator scratch (persists across grid steps)
    k = pl.program_id(2)

    if w_is_slab or x_is_slab:
        k_off = pl.multiple_of(k * tk, 128)

    if x_is_slab:
        x_blk = x_ref[:, pl.ds(k_off, tk)]      # 128-aligned lane slice (view)
    else:
        x_blk = x_ref[...]

    if w_is_slab:
        w_blk = w_ref[pl.ds(k_off, tk), :]      # 128-aligned sublane slice (view)
    else:
        w_blk = w_ref[...]

    # Native (m,k)x(k,n) contraction — weight is already pre-transposed to (K, N).
    prod = jnp.dot(x_blk, w_blk, preferred_element_type=jnp.float32)

    @pl.when(k == 0)
    def _():
        acc_ref[...] = prod                     # init folded into first k step

    @pl.when(k > 0)
    def _():
        acc_ref[...] += prod

    @pl.when(k == pl.num_programs(2) - 1)
    def _():
        o_ref[...] = (acc_ref[...] + b_ref[...]).astype(o_ref.dtype)


def fixed_linear(x, weight, bias, *, tm=256, tn=256, tk=1024,
                 compute_dtype=None, vmem_limit_bytes=None, force_mode=None):
    """Equivalent of torch.nn.Linear forward with fixed parameters.

    x:      (M, K)  activations
    weight: (N, K)  PyTorch layout (out_features, in_features)
    bias:   (N,)
    returns (M, N) in x's original dtype.
    """
    assert force_mode in (None, "w_resident", "x_resident", "streamed")
    M, K = x.shape
    N, K2 = weight.shape
    assert K == K2, "in_features mismatch"
    out_dtype = x.dtype

    if compute_dtype is not None:
        x = x.astype(compute_dtype)
        weight = weight.astype(compute_dtype)
    bias = bias.astype(jnp.float32)

    # Pre-transpose the fixed weight to (K, N).  Under jit this is a constant
    # fold (the weight never changes); the kernel gets a native (k, n) RHS.
    w_t = weight.T

    x_itemsize = jnp.dtype(x.dtype).itemsize
    w_itemsize = jnp.dtype(w_t.dtype).itemsize
    out_itemsize = jnp.dtype(out_dtype).itemsize
    pack = max(8, 32 // x_itemsize)             # sublane packing: 8 f32, 16 bf16, 32 int8

    # Tile fitting: shrink tiles to divisors of the aligned dims (no over-padding).
    tm, M_pad = _fit_tile(tm, M, pack)
    tn, N_pad = _fit_tile(tn, N, 128)
    tk, K_pad = _fit_tile(tk, K, 128)

    # Megacore hint (v7x has 2 TCs): make sure at least one parallel axis has
    # extent >= 2 when that costs no extra padding.
    ni, nj = M_pad // tm, N_pad // tn
    if ni == 1 and nj == 1:
        for cand in range(tn - 128, 0, -128):
            if N_pad % cand == 0:
                tn, nj = cand, N_pad // cand
                break
        else:
            for cand in range(tm - pack, 0, -pack):
                if M_pad % cand == 0:
                    tm, ni = cand, M_pad // cand
                    break
    nk = K_pad // tk

    # Zero padding: contributes nothing to the contraction, sliced off at the end.
    if (M_pad, K_pad) != (M, K):
        x = jnp.pad(x, ((0, M_pad - M), (0, K_pad - K)))
    if (K_pad, N_pad) != (K, N):
        w_t = jnp.pad(w_t, ((0, K_pad - K), (0, N_pad - N)))
    if N_pad != N:
        bias = jnp.pad(bias, (0, N_pad - N))
    bias2d = bias.reshape(1, N_pad)

    # VMEM budget with headroom (≈48 MiB on v7x, ≈96 MiB on v5e/v6e).
    try:
        vmem_cap = int(pltpu.get_tpu_info().vmem_capacity_bytes)
    except Exception:
        vmem_cap = 64 << 20
    budget = vmem_cap - max(16 << 20, vmem_cap // 4)

    def _vmem_est(x_blk_elems, w_blk_elems):
        return (2 * x_blk_elems * x_itemsize          # x buffer (double-buffered)
                + 2 * w_blk_elems * w_itemsize        # weight buffer
                + 2 * tm * tn * out_itemsize          # output tile
                + tm * tn * 4                         # f32 accumulator
                + 2 * 8 * tn * 4)                     # bias tile (sublane-padded)

    est_by_mode = {
        "w_resident": _vmem_est(tm * tk, K_pad * tn),
        "x_resident": _vmem_est(tm * K_pad, tk * tn),
        "streamed":   _vmem_est(tm * tk, tk * tn),
    }

    x_bytes = M_pad * K_pad * x_itemsize
    w_bytes = K_pad * N_pad * w_itemsize
    o_bytes = M_pad * N_pad * out_itemsize
    traffic = {
        "w_resident": w_bytes + x_bytes * nj + o_bytes,   # weight read once
        "x_resident": x_bytes + w_bytes * ni + o_bytes,   # x read once
    }

    if force_mode is not None:
        mode = force_mode
    else:
        fits = [(traffic[m], m) for m in ("w_resident", "x_resident")
                if est_by_mode[m] <= budget]
        mode = min(fits)[1] if fits else "streamed"

    est = est_by_mode[mode]
    if vmem_limit_bytes is None:
        vmem_limit_bytes = int(max(
            min(budget, max(int(1.5 * est) + (2 << 20), 32 << 20)),
            est + (2 << 20)))

    if mode == "w_resident":
        # grid (j, i, k): weight slab index (0, j) invariant across i and k
        # => the whole fixed weight is streamed from HBM exactly once per call.
        grid = (nj, ni, nk)
        in_specs = [
            pl.BlockSpec((tm, tk), lambda j, i, k: (i, k)),
            pl.BlockSpec((K_pad, tn), lambda j, i, k: (0, j)),
            pl.BlockSpec((1, tn), lambda j, i, k: (0, j)),
        ]
        out_spec = pl.BlockSpec((tm, tn), lambda j, i, k: (i, j))
        w_is_slab, x_is_slab = True, False
    elif mode == "x_resident":
        # grid (i, j, k): x slab index (i, 0) invariant across j and k
        # => x is streamed from HBM exactly once (weight re-read per i instead).
        grid = (ni, nj, nk)
        in_specs = [
            pl.BlockSpec((tm, K_pad), lambda i, j, k: (i, 0)),
            pl.BlockSpec((tk, tn), lambda i, j, k: (k, j)),
            pl.BlockSpec((1, tn), lambda i, j, k: (0, j)),
        ]
        out_spec = pl.BlockSpec((tm, tn), lambda i, j, k: (i, j))
        w_is_slab, x_is_slab = False, True
    else:  # streamed fallback — always fits VMEM
        grid = (nj, ni, nk)
        in_specs = [
            pl.BlockSpec((tm, tk), lambda j, i, k: (i, k)),
            pl.BlockSpec((tk, tn), lambda j, i, k: (k, j)),
            pl.BlockSpec((1, tn), lambda j, i, k: (0, j)),
        ]
        out_spec = pl.BlockSpec((tm, tn), lambda j, i, k: (i, j))
        w_is_slab, x_is_slab = False, False

    cost = pl.CostEstimate(
        flops=2 * M * N * K,
        transcendentals=0,
        bytes_accessed=int(x_bytes + w_bytes + o_bytes + N_pad * 4),
    )

    kernel = functools.partial(_fixed_linear_kernel, tk=tk,
                               w_is_slab=w_is_slab, x_is_slab=x_is_slab)

    out = pl.pallas_call(
        kernel,
        out_shape=jax.ShapeDtypeStruct((M_pad, N_pad), out_dtype),
        grid_spec=pltpu.PrefetchScalarGridSpec(
            num_scalar_prefetch=0,
            grid=grid,
            in_specs=in_specs,
            out_specs=out_spec,
            scratch_shapes=[pltpu.VMEM((tm, tn), jnp.float32)],
        ),
        compiler_params=pltpu.CompilerParams(
            dimension_semantics=("parallel", "parallel", "arbitrary"),
            vmem_limit_bytes=vmem_limit_bytes,
        ),
        cost_estimate=cost,
    )(x, w_t, bias2d)

    if (M_pad, N_pad) != (M, N):
        out = out[:M, :N]
    return out


if __name__ == "__main__":
    key = jax.random.PRNGKey(0)
    kx, kw, kb, kx2, kw2, kb2 = jax.random.split(key, 6)

    # --- Test 1: small PCA-style fixed linear (batch=8, in=32, out=128), f32. ---
    M, K, N = 8, 32, 128
    x = jax.random.normal(kx, (M, K), dtype=jnp.float32)
    weight = jax.random.normal(kw, (N, K), dtype=jnp.float32) * 0.1
    bias = jax.random.normal(kb, (N,), dtype=jnp.float32) * 0.01

    ref = x @ weight.T + bias
    out = jax.block_until_ready(fixed_linear(x, weight, bias))
    assert out.shape == (M, N)
    assert jnp.allclose(out, ref, atol=1e-4, rtol=1e-4)

    # --- Test 2: non-tile-aligned shapes, multi-tile grid with a real K reduction
    # (exercises padding, acc init/epilogue and the resident weight slab). ---
    M2, Kf2, N2 = 24, 200, 300
    x2 = jax.random.normal(kx2, (M2, Kf2), dtype=jnp.float32)
    w2 = jax.random.normal(kw2, (N2, Kf2), dtype=jnp.float32) * 0.05
    b2 = jax.random.normal(kb2, (N2,), dtype=jnp.float32) * 0.01
    ref2 = x2 @ w2.T + b2
    out2 = jax.block_until_ready(fixed_linear(x2, w2, b2, tm=16, tn=128, tk=128))
    assert out2.shape == (M2, N2)
    assert jnp.allclose(out2, ref2, atol=1e-3, rtol=1e-3)

    # --- Test 3: bf16 compute path for the fixed weight (fast MXU feed);
    # accumulation stays f32, tolerance limited by bf16 input rounding. ---
    out3 = jax.block_until_ready(
        fixed_linear(x, weight, bias, compute_dtype=jnp.bfloat16))
    assert jnp.allclose(out3, ref, atol=5e-2, rtol=5e-2)

    # --- Test 4: x-resident layout (x read once, weight streamed per i). ---
    out4 = jax.block_until_ready(
        fixed_linear(x2, w2, b2, tm=16, tn=128, tk=128, force_mode="x_resident"))
    assert jnp.allclose(out4, ref2, atol=1e-3, rtol=1e-3)

    # --- Test 5: fully streamed fallback (what a too-large-K slab degrades to). ---
    out5 = jax.block_until_ready(
        fixed_linear(x2, w2, b2, tm=16, tn=128, tk=128, force_mode="streamed"))
    assert jnp.allclose(out5, ref2, atol=1e-3, rtol=1e-3)

    print("KERNEL_OK")
</pallas_src>

<mosaic_0001>
module attributes {stable_mosaic.version = 11 : i64} {
  func.func @_fixed_linear_kernel(%arg0: i32, %arg1: i32, %arg2: i32, %arg3: memref<8x128xf32, #tpu.memory_space<vmem>>, %arg4: memref<128x128xf32, #tpu.memory_space<vmem>>, %arg5: memref<1x128xf32, #tpu.memory_space<vmem>>, %arg6: memref<8x128xf32, #tpu.memory_space<vmem>>, %arg7: memref<8x128xf32, #tpu.memory_space<vmem>>) attributes {dimension_semantics = [#tpu.dimension_semantics<parallel>, #tpu.dimension_semantics<parallel>, #tpu.dimension_semantics<arbitrary>], iteration_bounds = array<i64: 1, 1, 1>, scalar_prefetch = 0 : i64, scratch_operands = 1 : i64, tpu.core_type = #tpu.core_type<tc>, window_params = [{transform_indices = @transform_0, window_bounds = array<i64: 8, 128>}, {transform_indices = @transform_1, window_bounds = array<i64: 128, 128>}, {transform_indices = @transform_2, window_bounds = array<i64: 1, 128>}, {transform_indices = @transform_3, window_bounds = array<i64: 8, 128>}]} {
    %c128_i32 = arith.constant 128 : i32
    %0 = arith.muli %arg2, %c128_i32 : i32
    %1 = tpu.assume_multiple %0, 128 : i32
    %c0 = arith.constant 0 : index
    %c0_0 = arith.constant 0 : index
    %2 = vector.load %arg3[%c0, %c0_0] : memref<8x128xf32, #tpu.memory_space<vmem>>, vector<8x128xf32>
    %3 = arith.index_cast %1 : i32 to index
    %c0_1 = arith.constant 0 : index
    %4 = vector.load %arg4[%3, %c0_1] : memref<128x128xf32, #tpu.memory_space<vmem>>, vector<128x128xf32>
    %cst = arith.constant dense<0.000000e+00> : vector<8x128xf32>
    %5 = tpu.matmul %2, %4, %cst {dimension_numbers = #tpu.dot_dimension_numbers<[1], [0], [0], [1], [0, 0, 1, 1], [], []>} : vector<8x128xf32>, vector<128x128xf32>, vector<8x128xf32> -> vector<8x128xf32>
    %c0_i32 = arith.constant 0 : i32
    %6 = arith.cmpi eq, %arg2, %c0_i32 : i32
    %7 = arith.extui %6 : i1 to i32
    %c0_i32_2 = arith.constant 0 : i32
    %8 = arith.cmpi ne, %7, %c0_i32_2 : i32
    scf.if %8 {
      %c0_7 = arith.constant 0 : index
      %c0_8 = arith.constant 0 : index
      %15 = vector.load %arg7[%c0_7, %c0_8] : memref<8x128xf32, #tpu.memory_space<vmem>>, vector<8x128xf32>
      tpu.vector_store %arg7[%c0_7, %c0_8], %5 {strides = array<i32>} : memref<8x128xf32, #tpu.memory_space<vmem>>, vector<8x128xf32>,
    } else {
    }
    %c0_i32_3 = arith.constant 0 : i32
    %9 = arith.cmpi sgt, %arg2, %c0_i32_3 : i32
    %10 = arith.extui %9 : i1 to i32
    %c0_i32_4 = arith.constant 0 : i32
    %11 = arith.cmpi ne, %10, %c0_i32_4 : i32
    scf.if %11 {
      %c0_7 = arith.constant 0 : index
      %c0_8 = arith.constant 0 : index
      %15 = vector.load %arg7[%c0_7, %c0_8] : memref<8x128xf32, #tpu.memory_space<vmem>>, vector<8x128xf32>
      %16 = arith.addf %15, %5 : vector<8x128xf32>
      %c0_9 = arith.constant 0 : index
      %c0_10 = arith.constant 0 : index
      %17 = vector.load %arg7[%c0_9, %c0_10] : memref<8x128xf32, #tpu.memory_space<vmem>>, vector<8x128xf32>
      tpu.vector_store %arg7[%c0_9, %c0_10], %16 {strides = array<i32>} : memref<8x128xf32, #tpu.memory_space<vmem>>, vector<8x128xf32>,
    } else {
    }
    %c0_i32_5 = arith.constant 0 : i32
    %12 = arith.cmpi eq, %arg2, %c0_i32_5 : i32
    %13 = arith.extui %12 : i1 to i32
    %c0_i32_6 = arith.constant 0 : i32
    %14 = arith.cmpi ne, %13, %c0_i32_6 : i32
    scf.if %14 {
      %c0_7 = arith.constant 0 : index
      %c0_8 = arith.constant 0 : index
      %15 = vector.load %arg7[%c0_7, %c0_8] : memref<8x128xf32, #tpu.memory_space<vmem>>, vector<8x128xf32>
      %c0_9 = arith.constant 0 : index
      %c0_10 = arith.constant 0 : index
      %16 = vector.load %arg5[%c0_9, %c0_10] : memref<1x128xf32, #tpu.memory_space<vmem>>, vector<1x128xf32>
      %17 = vector.broadcast %16 : vector<1x128xf32> to vector<8x128xf32>
      %18 = arith.addf %15, %17 : vector<8x128xf32>
      %c0_11 = arith.constant 0 : index
      %c0_12 = arith.constant 0 : index
      %19 = vector.load %arg6[%c0_11, %c0_12] : memref<8x128xf32, #tpu.memory_space<vmem>>, vector<8x128xf32>
      tpu.vector_store %arg6[%c0_11, %c0_12], %18 {strides = array<i32>} : memref<8x128xf32, #tpu.memory_space<vmem>>, vector<8x128xf32>,
    } else {
    }
    return
  }
  func.func @transform_0(%arg0: i32, %arg1: i32, %arg2: i32) -> (i32, i32) {
    %c0_i32 = arith.constant 0 : i32
    return %arg1, %arg2 : i32, i32
  }
  func.func @transform_1(%arg0: i32, %arg1: i32, %arg2: i32) -> (i32, i32) {
    %c0_i32 = arith.constant 0 : i32
    %c0_i32_0 = arith.constant 0 : i32
    return %c0_i32, %arg0 : i32, i32
  }
  func.func @transform_2(%arg0: i32, %arg1: i32, %arg2: i32) -> (i32, i32) {
    %c0_i32 = arith.constant 0 : i32
    %c0_i32_0 = arith.constant 0 : i32
    return %c0_i32, %arg0 : i32, i32
  }
  func.func @transform_3(%arg0: i32, %arg1: i32, %arg2: i32) -> (i32, i32) {
    %c0_i32 = arith.constant 0 : i32
    return %arg1, %arg0 : i32, i32
  }
}

</mosaic_0001>

<llo_original>
// kernel: tpu_custom_call.1
$region0: #{tpu_custom_call.1}
  #allocation0 [shape = 'u32[]', space=smem, size = 0x4, offset = 0x4, fixed_abs, tag = 'smem constant byte address 0x4 - core index']
  #allocation1 [shape = 'u32[72,128]{1,0:T(1,128)}', space=vmem, size = 0x9000, scoped, tag = 'internal scratch']
  #allocation2 [shape = 'f32[8,128]{1,0:T(8,128)}', space=vmem, size = 0x1000, scoped, tag = 'scratch operand']
  %s0 = inlined_call_operand.hbm [shape: f32[8,128], index: 0, kind: input, shape index: {}]
  %s1 = inlined_call_operand.hbm [shape: f32[128,128], index: 1, kind: input, shape index: {}]
  %s2 = inlined_call_operand.vmem [shape: f32[1,128], index: 2, kind: input, shape index: {}]
  %s3 = inlined_call_operand.hbm [shape: f32[8,128], index: 3, kind: output, shape index: {}]
  %s4 = sld [smem:[#allocation0]]
  $region42: #{tpu_custom_call.1} parent=0
    _
  %s6 = ssub.s32 1, %s4
  %s7 = scalar_select 0, %s6, %s4
  $region1: #{tpu_custom_call.1} parent=0
    #allocation3 [shape = 'u8[4096]{0}', space=vmem, size = 0x1000, scoped, tag = 'input window, operand 0, single buffered']
    #allocation4 [shape = 's32[1]{0}', space=sflag, size = 0x4, scoped, tag = 'scoped memory for tpu_custom_call.1']
    #allocation5 [shape = 's32[1]{0}', space=sflag, size = 0x4, scoped, tag = 'scoped memory for tpu_custom_call.1']
    #allocation6 [shape = 'u8[65536]{0}', space=vmem, size = 0x10000, scoped, tag = 'input window, operand 1, single buffered']
    #allocation7 [shape = 's32[1]{0}', space=sflag, size = 0x4, scoped, tag = 'scoped memory for tpu_custom_call.1']
    #allocation8 [shape = 'u8[4096]{0}', space=vmem, size = 0x1000, scoped, tag = 'output window, operand 0, single buffered']
    %8 = vsyncpa [#allocation4], 0
    %9 = vsyncpa [#allocation7], 0
    %10 = vsyncpa [#allocation5], 0
    // Predicated region
    $region2: #{tpu_custom_call.1} parent=1 // pred_check
      _
    $region3: #{tpu_custom_call.1} parent=1 // pred_check_branch
      %12 = sbr.rel (0) target = $region5
    $region4: #{tpu_custom_call.1} parent=1 // pred_region
      %14 = vsyncadd [#allocation4], 0
      %s16 = sshll.u32 %s0, 4
      %s17 = int_to_ptr.hbm [resolvable:$true] %s16
      %s18 = sshll.u32 [#allocation3], 4
      %s19 = int_to_ptr.vmem [resolvable:$true] %s18
      %21 = dma.hbm_to_vmem [thread:$0]  %s17, 128, %s19, [#allocation4]
    $region5: #{tpu_custom_call.1} parent=1 // pred_fallthru
      _
    // Predicated region
    $region6: #{tpu_custom_call.1} parent=1 // pred_check
      _
    $region7: #{tpu_custom_call.1} parent=1 // pred_check_branch
      %23 = sbr.rel (0) target = $region9
    $region8: #{tpu_custom_call.1} parent=1 // pred_region
      %25 = vsyncadd [#allocation7], 0
      %s26 = sshll.u32 %s1, 4
      %s27 = int_to_ptr.hbm [resolvable:$true] %s26
      %s28 = sshll.u32 [#allocation6], 4
      %s29 = int_to_ptr.vmem [resolvable:$true] %s28
      %34 = dma.hbm_to_vmem [thread:$0]  %s27, 2048, %s29, [#allocation7], 128, 128, 8
    $region9: #{tpu_custom_call.1} parent=1 // pred_fallthru
      _
    // Predicated region
    $region10: #{tpu_custom_call.1} parent=1 // pred_check
      _
    $region11: #{tpu_custom_call.1} parent=1 // pred_check_branch
      %36 = sbr.rel (0) target = $region13
    $region12: #{tpu_custom_call.1} parent=1 // pred_region
      _
    $region13: #{tpu_custom_call.1} parent=1 // pred_fallthru
      _
    // Predicated region
    $region14: #{tpu_custom_call.1} parent=1 // pred_check
      _
    $region15: #{tpu_custom_call.1} parent=1 // pred_check_branch
      %38 = sbr.rel (0) target = $region17
    $region16: #{tpu_custom_call.1} parent=1 // pred_region
      %40 = dma.done [#allocation4], 128
    $region17: #{tpu_custom_call.1} parent=1 // pred_fallthru
      _
    // Predicated region
    $region18: #{tpu_custom_call.1} parent=1 // pred_check
      _
    $region19: #{tpu_custom_call.1} parent=1 // pred_check_branch
      %42 = sbr.rel (0) target = $region21
    $region20: #{tpu_custom_call.1} parent=1 // pred_region
      %44 = dma.done [#allocation7], 2048
    $region21: #{tpu_custom_call.1} parent=1 // pred_fallthru
      _
    %s45 = smul.u32 0, 128
    %v46 = vld [vmem:[#allocation3] sm:$0xff]
    %s47 = scalar_lea.vmem [#allocation6], %s45
    %v48 = vld [vmem:[%s47] sm:$0xff]
    %v49 = vld [vmem:[%s47 + $0x8] sm:$0xff]
    %v50 = vld [vmem:[%s47 + $0x10] sm:$0xff]
    %v51 = vld [vmem:[%s47 + $0x18] sm:$0xff]
    %v52 = vld [vmem:[%s47 + $0x20] sm:$0xff]
    %v53 = vld [vmem:[%s47 + $0x28] sm:$0xff]
    %v54 = vld [vmem:[%s47 + $0x30] sm:$0xff]
    %v55 = vld [vmem:[%s47 + $0x38] sm:$0xff]
    %v56 = vld [vmem:[%s47 + $0x40] sm:$0xff]
    %v57 = vld [vmem:[%s47 + $0x48] sm:$0xff]
    %v58 = vld [vmem:[%s47 + $0x50] sm:$0xff]
    %v59 = vld [vmem:[%s47 + $0x58] sm:$0xff]
    %v60 = vld [vmem:[%s47 + $0x60] sm:$0xff]
    %v61 = vld [vmem:[%s47 + $0x68] sm:$0xff]
    %v62 = vld [vmem:[%s47 + $0x70] sm:$0xff]
    %v63 = vld [vmem:[%s47 + $0x78] sm:$0xff]
    %64 = vmatpush.msra.mxu0 %v63
    %65 = vmatpush.msra.mxu0 %v62
    %66 = vmatpush.msra.mxu0 %v61
    %67 = vmatpush.msra.mxu0 %v60
    %68 = vmatpush.msra.mxu0 %v59
    %69 = vmatpush.msra.mxu0 %v58
    %70 = vmatpush.msra.mxu0 %v57
    %71 = vmatpush.msra.mxu0 %v56
    %72 = vmatpush.msra.mxu0 %v55
    %73 = vmatpush.msra.mxu0 %v54
    %74 = vmatpush.msra.mxu0 %v53
    %75 = vmatpush.msra.mxu0 %v52
    %76 = vmatpush.msra.mxu0 %v51
    %77 = vmatpush.msra.mxu0 %v50
    %78 = vmatpush.msra.mxu0 %v49
    %79 = vmatpush.msra.mxu0 %v48
    %80 = vmatmul.f32.gmra.mxu0 %v46
    %v81 = vpop.f32.mrf.mxu0
    %v82 = vadd.f32 0.0, %v81
    %83 = vdwg.mxu0
    %p84 = scmp.eq.s32.totalorder 0, 0
    // Predicated region
    $region22: #{tpu_custom_call.1} parent=1 // pred_check
      %p85 = pneg %p84
    $region23: #{tpu_custom_call.1} parent=1 // pred_check_branch
      %87 = sbr.rel (%p85) target = $region25
    $region24: #{tpu_custom_call.1} parent=1 // pred_region
      %88 = vst [vmem:[#allocation2] sm:$0xff] %v82
    $region25: #{tpu_custom_call.1} parent=1 // pred_fallthru
      _
    %p89 = scmp.gt.s32.totalorder 0, 0
    // Predicated region
    $region26: #{tpu_custom_call.1} parent=1 // pred_check
      %p90 = pneg %p89
    $region27: #{tpu_custom_call.1} parent=1 // pred_check_branch
      %92 = sbr.rel (%p90) target = $region29
    $region28: #{tpu_custom_call.1} parent=1 // pred_region
      %v93 = vld [vmem:[#allocation2] sm:$0xff]
      %v94 = vadd.f32 %v93, %v82
      %95 = vst [vmem:[#allocation2] sm:$0xff] %v94
    $region29: #{tpu_custom_call.1} parent=1 // pred_fallthru
      _
    // Predicated region
    $region30: #{tpu_custom_call.1} parent=1 // pred_check
      %p96 = pneg %p84
    $region31: #{tpu_custom_call.1} parent=1 // pred_check_branch
      %98 = sbr.rel (%p96) target = $region33
    $region32: #{tpu_custom_call.1} parent=1 // pred_region
      %v99 = vld [vmem:[#allocation2] sm:$0xff]
      %v100 = vld [vmem:[%s2] sm:$0x1]
      %v102 = vperm.slane %v100, 0
      %v104 = vadd.f32 %v99, %v102
      %105 = vst [vmem:[#allocation8] sm:$0xff] %v104
    $region33: #{tpu_custom_call.1} parent=1 // pred_fallthru
      _
    // Predicated region
    $region34: #{tpu_custom_call.1} parent=1 // pred_check
      _
    $region35: #{tpu_custom_call.1} parent=1 // pred_check_branch
      %107 = sbr.rel (0) target = $region37
    $region36: #{tpu_custom_call.1} parent=1 // pred_region
      %109 = vsyncadd [#allocation5], 0
      %s111 = sshll.u32 [#allocation8], 4
      %s112 = int_to_ptr.vmem [resolvable:$true] %s111
      %s113 = sshll.u32 %s3, 4
      %s114 = int_to_ptr.hbm [resolvable:$true] %s113
      %116 = dma.vmem_to_hbm [thread:$0]  %s112, 128, %s114, [#allocation5]
    $region37: #{tpu_custom_call.1} parent=1 // pred_fallthru
      _
    // Predicated region
    $region38: #{tpu_custom_call.1} parent=1 // pred_check
      _
    $region39: #{tpu_custom_call.1} parent=1 // pred_check_branch
      %118 = sbr.rel (0) target = $region41
    $region40: #{tpu_custom_call.1} parent=1 // pred_region
      %120 = dma.done [#allocation5], 128
    $region41: #{tpu_custom_call.1} parent=1 // pred_fallthru
      _
    %121 = vsyncpa [#allocation4], 1
    %122 = vsyncpa [#allocation7], 1
    %123 = vsyncpa [#allocation5], 1

</llo_original>
